<compile_context>
chip_gen: v7x
topology: tpu7x:2x2x1
jax: 0.10.0
libtpu: 0.0.40
codegen_flags: <defaults>
</compile_context>

<pallas_src>
import math

import jax
import jax.numpy as jnp
import numpy as np
from jax import lax
from jax.experimental import pallas as pl
from jax.experimental.pallas import tpu as pltpu

# ---- small synthetic config (mirrors GemmaConfig structure) ----
HIDDEN = 64          # config.hidden_size
NUM_HEADS = 4        # config.num_attention_heads
NUM_KV_HEADS = 2     # config.num_key_value_head
HEAD_DIM = 32        # config.head_dim
GRP = NUM_HEADS // NUM_KV_HEADS
ROPE_THETA = 10000.0
QKV_OUT = NUM_HEADS * HEAD_DIM + 2 * NUM_KV_HEADS * HEAD_DIM   # 256


# ----------------------- tiled matmul (projections) -----------------------

def _matmul_kernel(x_ref, w_ref, o_ref, acc_ref):
    @pl.when(pl.program_id(2) == 0)
    def _():
        acc_ref[...] = jnp.zeros_like(acc_ref)

    acc_ref[...] += jnp.dot(x_ref[...], w_ref[...],
                            preferred_element_type=jnp.float32)

    @pl.when(pl.program_id(2) == pl.num_programs(2) - 1)
    def _():
        o_ref[...] = acc_ref[...].astype(o_ref.dtype)


def linear(x2d, w_t, *, tm=128, tn=256, tk=512):
    """x2d: (M, K) f32; w_t: (K, N) f32 (pre-transposed weight). Returns (M, N)."""
    M, K = x2d.shape
    N = w_t.shape[1]
    tm, tn, tk = min(tm, M), min(tn, N), min(tk, K)
    assert M % tm == 0 and N % tn == 0 and K % tk == 0
    return pl.pallas_call(
        _matmul_kernel,
        out_shape=jax.ShapeDtypeStruct((M, N), jnp.float32),
        grid_spec=pltpu.PrefetchScalarGridSpec(
            num_scalar_prefetch=0,
            grid=(M // tm, N // tn, K // tk),
            in_specs=[pl.BlockSpec((tm, tk), lambda i, j, k: (i, k)),
                      pl.BlockSpec((tk, tn), lambda i, j, k: (k, j))],
            out_specs=pl.BlockSpec((tm, tn), lambda i, j, k: (i, j)),
            scratch_shapes=[pltpu.VMEM((tm, tn), jnp.float32)]),
        compiler_params=pltpu.CompilerParams(
            dimension_semantics=("parallel", "parallel", "arbitrary")),
    )(x2d, w_t)


# ----------------------- fused RoPE + attention -----------------------

def _rope_attn_kernel(q_ref, k_ref, v_ref, cos_ref, sin_ref, o_ref):
    # q_ref: (H, T, D); k_ref/v_ref: (KV, T, D); cos/sin: (T, D); o_ref: (T, H*D)
    T, D = cos_ref.shape
    H = q_ref.shape[0]
    KV = k_ref.shape[0]
    grp = H // KV
    half = D // 2

    cos = cos_ref[...]
    sin = sin_ref[...]
    scale = 1.0 / math.sqrt(D)
    cos_q = cos * scale            # fold 1/sqrt(D) into q's RoPE (T*D work)
    sin_q = sin * scale

    def rot_half(x):               # rotate_half on a (T, D) tile
        return jnp.concatenate([-x[:, half:], x[:, :half]], axis=-1)

    outs = []
    for kv in range(KV):                       # static loops: tiny H / KV
        k_h = k_ref[kv]
        v_h = v_ref[kv]
        k_rot = k_h * cos + rot_half(k_h) * sin    # RoPE k ONCE per kv head
        for g in range(grp):
            q_h = q_ref[kv * grp + g]
            q_rot = q_h * cos_q + rot_half(q_h) * sin_q
            # QK^T without materializing k_rot.T: contract last dim of both.
            s = lax.dot_general(q_rot, k_rot, (((1,), (1,)), ((), ())),
                                preferred_element_type=jnp.float32)
            s = s - jnp.max(s, axis=-1, keepdims=True)
            p = jnp.exp(s)
            # EUP reciprocal instead of a per-element VALU divide.
            # (approx=True is the production choice; exact keeps 1e-4 tol.)
            p = p * pl.reciprocal(jnp.sum(p, axis=-1, keepdims=True),
                                  approx=False)
            outs.append(jnp.dot(p, v_h, preferred_element_type=jnp.float32))

    # Single lane-dense (T, H*D) store (heads in order 0..H-1).
    o_ref[...] = jnp.concatenate(outs, axis=-1)


def fused_rope_attention(q, k, v, cos, sin):
    """q: (B,H,T,D); k,v: (B,KV,T,D); cos,sin: (B,T,D). Returns (B, T, H*D)."""
    B, H, T, D = q.shape
    KV = k.shape[1]
    return pl.pallas_call(
        _rope_attn_kernel,
        out_shape=jax.ShapeDtypeStruct((B, T, H * D), jnp.float32),
        grid=(B,),
        in_specs=[
            pl.BlockSpec((None, H, T, D), lambda b: (b, 0, 0, 0)),
            pl.BlockSpec((None, KV, T, D), lambda b: (b, 0, 0, 0)),
            pl.BlockSpec((None, KV, T, D), lambda b: (b, 0, 0, 0)),
            pl.BlockSpec((None, T, D), lambda b: (b, 0, 0)),
            pl.BlockSpec((None, T, D), lambda b: (b, 0, 0)),
        ],
        out_specs=pl.BlockSpec((None, T, H * D), lambda b: (b, 0, 0)),
        compiler_params=pltpu.CompilerParams(
            dimension_semantics=("parallel",)),
    )(q, k, v, cos, sin)


# ----------------------- plain-JAX glue -----------------------

def rotary_embedding(position_ids, head_dim, theta):
    # GemmaRotaryEmbedding.forward
    inv_freq = 1.0 / (theta ** (jnp.arange(0, head_dim, 2, dtype=jnp.float32)
                                / head_dim))
    freqs = position_ids.astype(jnp.float32)[:, :, None] * inv_freq[None, None, :]
    emb = jnp.concatenate([freqs, freqs], axis=-1)   # (B, T, D)
    return jnp.cos(emb), jnp.sin(emb)


def prepare_params(params):
    """One-time weight prep: fuse q/k/v and pre-transpose to (K, N)."""
    w_qkv = jnp.concatenate(
        [params["q_proj"], params["k_proj"], params["v_proj"]], axis=0)
    return {"w_qkv_t": jnp.asarray(w_qkv.T),       # (HIDDEN, QKV_OUT)
            "w_o_t": jnp.asarray(params["o_proj"].T)}   # (H*D, HIDDEN)


def gemma_attention_forward(fast_params, x, position_ids):
    """GemmaAttention.forward with attention_mask=None, kv_cache=None."""
    B, T, C = x.shape
    x2d = x.reshape(B * T, C)

    # Single fused q/k/v projection.
    qkv = linear(x2d, fast_params["w_qkv_t"])          # (B*T, 256)

    q_end = NUM_HEADS * HEAD_DIM
    k_end = q_end + NUM_KV_HEADS * HEAD_DIM
    q = qkv[:, :q_end].reshape(B, T, NUM_HEADS, HEAD_DIM).transpose(0, 2, 1, 3)
    k = qkv[:, q_end:k_end].reshape(B, T, NUM_KV_HEADS, HEAD_DIM).transpose(0, 2, 1, 3)
    v = qkv[:, k_end:].reshape(B, T, NUM_KV_HEADS, HEAD_DIM).transpose(0, 2, 1, 3)

    cos, sin = rotary_embedding(position_ids, HEAD_DIM, ROPE_THETA)

    # TODO(synk): KVCache.update (stateful python-list cache) is not modeled;
    # this implements the kv_cache=None path.
    y = fused_rope_attention(q, k, v, cos, sin)        # (B, T, H*D) lane-dense

    # TODO(synk): the reference passes y (B,H,T,D) straight into o_proj, which
    # is shape-inconsistent; the intended (B,T,H*D) layout is produced directly
    # by the attention kernel (no wrapper transpose needed).
    out = linear(y.reshape(B * T, NUM_HEADS * HEAD_DIM), fast_params["w_o_t"])
    return out.reshape(B, T, C)


# ----------------------- pure-JAX reference -----------------------

def reference_forward(params, x, position_ids):
    hp = jax.lax.Precision.HIGHEST
    B, T, C = x.shape
    q = jnp.einsum('btc,nc->btn', x, params["q_proj"], precision=hp)
    k = jnp.einsum('btc,nc->btn', x, params["k_proj"], precision=hp)
    v = jnp.einsum('btc,nc->btn', x, params["v_proj"], precision=hp)
    q = q.reshape(B, T, NUM_HEADS, HEAD_DIM).transpose(0, 2, 1, 3)
    k = k.reshape(B, T, NUM_KV_HEADS, HEAD_DIM).transpose(0, 2, 1, 3)
    v = v.reshape(B, T, NUM_KV_HEADS, HEAD_DIM).transpose(0, 2, 1, 3)
    cos, sin = rotary_embedding(position_ids, HEAD_DIM, ROPE_THETA)
    cos_b, sin_b = cos[:, None], sin[:, None]

    def rot_half(t):
        half = t.shape[-1] // 2
        return jnp.concatenate([-t[..., half:], t[..., :half]], axis=-1)

    q = q * cos_b + rot_half(q) * sin_b
    k = k * cos_b + rot_half(k) * sin_b
    k = jnp.repeat(k, GRP, axis=1)
    v = jnp.repeat(v, GRP, axis=1)
    s = jnp.einsum('bhqd,bhkd->bhqk', q, k, precision=hp) / math.sqrt(HEAD_DIM)
    p = jax.nn.softmax(s, axis=-1)
    y = jnp.einsum('bhqk,bhkd->bhqd', p, v, precision=hp)
    y = y.transpose(0, 2, 1, 3).reshape(B, T, NUM_HEADS * HEAD_DIM)
    return jnp.einsum('btn,cn->btc', y, params["o_proj"], precision=hp)


# ----------------------- main -----------------------

if __name__ == "__main__":
    B, T = 2, 8
    key = jax.random.PRNGKey(0)
    k1, k2, k3, k4, k5 = jax.random.split(key, 5)
    params = {
        "q_proj": 0.05 * jax.random.normal(k1, (NUM_HEADS * HEAD_DIM, HIDDEN), jnp.float32),
        "k_proj": 0.05 * jax.random.normal(k2, (NUM_KV_HEADS * HEAD_DIM, HIDDEN), jnp.float32),
        "v_proj": 0.05 * jax.random.normal(k3, (NUM_KV_HEADS * HEAD_DIM, HIDDEN), jnp.float32),
        "o_proj": 0.05 * jax.random.normal(k4, (HIDDEN, NUM_HEADS * HEAD_DIM), jnp.float32),
    }
    fast_params = prepare_params(params)

    x = jax.random.normal(k5, (B, T, HIDDEN), jnp.float32)
    position_ids = jnp.broadcast_to(jnp.arange(T, dtype=jnp.int32)[None, :], (B, T))

    out = gemma_attention_forward(fast_params, x, position_ids)
    out = jax.block_until_ready(out)

    ref = reference_forward(params, x, position_ids)
    np.testing.assert_allclose(np.asarray(out), np.asarray(ref),
                               rtol=1e-4, atol=1e-4)
    print("KERNEL_OK")
</pallas_src>

<mosaic_0001>
module attributes {stable_mosaic.version = 11 : i64} {
  func.func @_matmul_kernel(%arg0: i32, %arg1: i32, %arg2: i32, %arg3: memref<16x64xf32, #tpu.memory_space<vmem>>, %arg4: memref<64x256xf32, #tpu.memory_space<vmem>>, %arg5: memref<16x256xf32, #tpu.memory_space<vmem>>, %arg6: memref<16x256xf32, #tpu.memory_space<vmem>>) attributes {dimension_semantics = [#tpu.dimension_semantics<parallel>, #tpu.dimension_semantics<parallel>, #tpu.dimension_semantics<arbitrary>], iteration_bounds = array<i64: 1, 1, 1>, scalar_prefetch = 0 : i64, scratch_operands = 1 : i64, tpu.core_type = #tpu.core_type<tc>, window_params = [{transform_indices = @transform_0, window_bounds = array<i64: 16, 64>}, {transform_indices = @transform_1, window_bounds = array<i64: 64, 256>}, {transform_indices = @transform_2, window_bounds = array<i64: 16, 256>}]} {
    %c0_i32 = arith.constant 0 : i32
    %0 = arith.cmpi eq, %arg2, %c0_i32 : i32
    %1 = arith.extui %0 : i1 to i32
    %c0_i32_0 = arith.constant 0 : i32
    %2 = arith.cmpi ne, %1, %c0_i32_0 : i32
    scf.if %2 {
      %cst_10 = arith.constant 0.000000e+00 : f32
      %12 = vector.broadcast %cst_10 : f32 to vector<16x256xf32>
      %c0_11 = arith.constant 0 : index
      %c0_12 = arith.constant 0 : index
      %13 = vector.load %arg6[%c0_11, %c0_12] : memref<16x256xf32, #tpu.memory_space<vmem>>, vector<16x256xf32>
      tpu.vector_store %arg6[%c0_11, %c0_12], %12 {strides = array<i32>} : memref<16x256xf32, #tpu.memory_space<vmem>>, vector<16x256xf32>,
    } else {
    }
    %c0 = arith.constant 0 : index
    %c0_1 = arith.constant 0 : index
    %3 = vector.load %arg6[%c0, %c0_1] : memref<16x256xf32, #tpu.memory_space<vmem>>, vector<16x256xf32>
    %c0_2 = arith.constant 0 : index
    %c0_3 = arith.constant 0 : index
    %4 = vector.load %arg3[%c0_2, %c0_3] : memref<16x64xf32, #tpu.memory_space<vmem>>, vector<16x64xf32>
    %c0_4 = arith.constant 0 : index
    %c0_5 = arith.constant 0 : index
    %5 = vector.load %arg4[%c0_4, %c0_5] : memref<64x256xf32, #tpu.memory_space<vmem>>, vector<64x256xf32>
    %cst = arith.constant dense<0.000000e+00> : vector<16x256xf32>
    %6 = tpu.matmul %4, %5, %cst {dimension_numbers = #tpu.dot_dimension_numbers<[1], [0], [0], [1], [0, 0, 1, 1], [], []>} : vector<16x64xf32>, vector<64x256xf32>, vector<16x256xf32> -> vector<16x256xf32>
    %7 = arith.addf %3, %6 : vector<16x256xf32>
    %c0_6 = arith.constant 0 : index
    %c0_7 = arith.constant 0 : index
    %8 = vector.load %arg6[%c0_6, %c0_7] : memref<16x256xf32, #tpu.memory_space<vmem>>, vector<16x256xf32>
    tpu.vector_store %arg6[%c0_6, %c0_7], %7 {strides = array<i32>} : memref<16x256xf32, #tpu.memory_space<vmem>>, vector<16x256xf32>,
    %c0_i32_8 = arith.constant 0 : i32
    %9 = arith.cmpi eq, %arg2, %c0_i32_8 : i32
    %10 = arith.extui %9 : i1 to i32
    %c0_i32_9 = arith.constant 0 : i32
    %11 = arith.cmpi ne, %10, %c0_i32_9 : i32
    scf.if %11 {
      %c0_10 = arith.constant 0 : index
      %c0_11 = arith.constant 0 : index
      %12 = vector.load %arg6[%c0_10, %c0_11] : memref<16x256xf32, #tpu.memory_space<vmem>>, vector<16x256xf32>
      %c0_12 = arith.constant 0 : index
      %c0_13 = arith.constant 0 : index
      %13 = vector.load %arg5[%c0_12, %c0_13] : memref<16x256xf32, #tpu.memory_space<vmem>>, vector<16x256xf32>
      tpu.vector_store %arg5[%c0_12, %c0_13], %12 {strides = array<i32>} : memref<16x256xf32, #tpu.memory_space<vmem>>, vector<16x256xf32>,
    } else {
    }
    return
  }
  func.func @transform_0(%arg0: i32, %arg1: i32, %arg2: i32) -> (i32, i32) {
    %c0_i32 = arith.constant 0 : i32
    return %arg0, %arg2 : i32, i32
  }
  func.func @transform_1(%arg0: i32, %arg1: i32, %arg2: i32) -> (i32, i32) {
    %c0_i32 = arith.constant 0 : i32
    return %arg2, %arg1 : i32, i32
  }
  func.func @transform_2(%arg0: i32, %arg1: i32, %arg2: i32) -> (i32, i32) {
    %c0_i32 = arith.constant 0 : i32
    return %arg0, %arg1 : i32, i32
  }
}

</mosaic_0001>

<llo_original>
// kernel: tpu_custom_call.1
$region0: #{tpu_custom_call.1}
  #allocation0 [shape = 'u32[]', space=smem, size = 0x4, offset = 0x4, fixed_abs, tag = 'smem constant byte address 0x4 - core index']
  #allocation1 [shape = 'u32[144,128]{1,0:T(1,128)}', space=vmem, size = 0x12000, scoped, tag = 'internal scratch']
  #allocation2 [shape = 'f32[16,256]{1,0:T(8,128)}', space=vmem, size = 0x4000, scoped, tag = 'scratch operand']
  %s0 = inlined_call_operand.hbm [shape: f32[16,64], index: 0, kind: input, shape index: {}]
  %s1 = inlined_call_operand.hbm [shape: f32[64,256], index: 1, kind: input, shape index: {}]
  %s2 = inlined_call_operand.hbm [shape: f32[16,256], index: 2, kind: output, shape index: {}]
  %s3 = sld [smem:[#allocation0]]
  $region34: #{tpu_custom_call.1} parent=0
    _
  %s5 = ssub.s32 1, %s3
  %s6 = scalar_select 0, %s5, %s3
  $region1: #{tpu_custom_call.1} parent=0
    #allocation3 [shape = 'u8[8192]{0}', space=vmem, size = 0x2000, scoped, tag = 'input window, operand 0, single buffered']
    #allocation4 [shape = 's32[1]{0}', space=sflag, size = 0x4, scoped, tag = 'scoped memory for tpu_custom_call.1']
    #allocation5 [shape = 's32[1]{0}', space=sflag, size = 0x4, scoped, tag = 'scoped memory for tpu_custom_call.1']
    #allocation6 [shape = 'u8[65536]{0}', space=vmem, size = 0x10000, scoped, tag = 'input window, operand 1, single buffered']
    #allocation7 [shape = 's32[1]{0}', space=sflag, size = 0x4, scoped, tag = 'scoped memory for tpu_custom_call.1']
    #allocation8 [shape = 'u8[16384]{0}', space=vmem, size = 0x4000, scoped, tag = 'output window, operand 0, single buffered']
    %7 = vsyncpa [#allocation4], 0
    %8 = vsyncpa [#allocation7], 0
    %9 = vsyncpa [#allocation5], 0
    // Predicated region
    $region2: #{tpu_custom_call.1} parent=1 // pred_check
      _
    $region3: #{tpu_custom_call.1} parent=1 // pred_check_branch
      %11 = sbr.rel (0) target = $region5
    $region4: #{tpu_custom_call.1} parent=1 // pred_region
      %s13 = ssub.s32 256, 256
      %14 = vsyncadd [#allocation4], %s13
      %s15 = sshll.u32 [#allocation3], 4
      %s16 = int_to_ptr.vmem [resolvable:$true] %s15
      %21 = dma.hbm_to_vmem [thread:$0]  %s0, 256, %s16, [#allocation4], 128, 128, 8
    $region5: #{tpu_custom_call.1} parent=1 // pred_fallthru
      _
    // Predicated region
    $region6: #{tpu_custom_call.1} parent=1 // pred_check
      _
    $region7: #{tpu_custom_call.1} parent=1 // pred_check_branch
      %23 = sbr.rel (0) target = $region9
    $region8: #{tpu_custom_call.1} parent=1 // pred_region
      %s25 = ssub.s32 2048, 2048
      %26 = vsyncadd [#allocation7], %s25
      %s27 = sshll.u32 [#allocation6], 4
      %s28 = int_to_ptr.vmem [resolvable:$true] %s27
      %33 = dma.hbm_to_vmem [thread:$0]  %s1, 2048, %s28, [#allocation7], 256, 256, 16
    $region9: #{tpu_custom_call.1} parent=1 // pred_fallthru
      _
    // Predicated region
    $region10: #{tpu_custom_call.1} parent=1 // pred_check
      _
    $region11: #{tpu_custom_call.1} parent=1 // pred_check_branch
      %35 = sbr.rel (0) target = $region13
    $region12: #{tpu_custom_call.1} parent=1 // pred_region
      %36 = dma.done [#allocation4], 256
    $region13: #{tpu_custom_call.1} parent=1 // pred_fallthru
      _
    // Predicated region
    $region14: #{tpu_custom_call.1} parent=1 // pred_check
      _
    $region15: #{tpu_custom_call.1} parent=1 // pred_check_branch
      %38 = sbr.rel (0) target = $region17
    $region16: #{tpu_custom_call.1} parent=1 // pred_region
      %39 = dma.done [#allocation7], 2048
    $region17: #{tpu_custom_call.1} parent=1 // pred_fallthru
      _
    %p40 = scmp.eq.s32.totalorder 0, 0
    // Predicated region
    $region18: #{tpu_custom_call.1} parent=1 // pred_check
      %p41 = pneg %p40
    $region19: #{tpu_custom_call.1} parent=1 // pred_check_branch
      %43 = sbr.rel (%p41) target = $region21
    $region20: #{tpu_custom_call.1} parent=1 // pred_region
      %44 = vst [vmem:[#allocation2] sm:$0xff] 0.0
      %45 = vst [vmem:[#allocation2 + $0x8] sm:$0xff] 0.0
      %46 = vst [vmem:[#allocation2 + $0x10] sm:$0xff] 0.0
      %47 = vst [vmem:[#allocation2 + $0x18] sm:$0xff] 0.0
    $region21: #{tpu_custom_call.1} parent=1 // pred_fallthru
      _
    %v48 = vld [vmem:[#allocation2] sm:$0xff]
    %v49 = vld [vmem:[#allocation2 + $0x8] sm:$0xff]
    %v50 = vld [vmem:[#allocation2 + $0x10] sm:$0xff]
    %v51 = vld [vmem:[#allocation2 + $0x18] sm:$0xff]
    %v52 = vld [vmem:[#allocation3] sm:$0xff]
    %v53 = vld [vmem:[#allocation3 + $0x8] sm:$0xff]
    %v54 = vld [vmem:[#allocation6] sm:$0xff]
    %v55 = vld [vmem:[#allocation6 + $0x8] sm:$0xff]
    %v56 = vld [vmem:[#allocation6 + $0x10] sm:$0xff]
    %v57 = vld [vmem:[#allocation6 + $0x18] sm:$0xff]
    %v58 = vld [vmem:[#allocation6 + $0x20] sm:$0xff]
    %v59 = vld [vmem:[#allocation6 + $0x28] sm:$0xff]
    %v60 = vld [vmem:[#allocation6 + $0x30] sm:$0xff]
    %v61 = vld [vmem:[#allocation6 + $0x38] sm:$0xff]
    %v62 = vld [vmem:[#allocation6 + $0x40] sm:$0xff]
    %v63 = vld [vmem:[#allocation6 + $0x48] sm:$0xff]
    %v64 = vld [vmem:[#allocation6 + $0x50] sm:$0xff]
    %v65 = vld [vmem:[#allocation6 + $0x58] sm:$0xff]
    %v66 = vld [vmem:[#allocation6 + $0x60] sm:$0xff]
    %v67 = vld [vmem:[#allocation6 + $0x68] sm:$0xff]
    %v68 = vld [vmem:[#allocation6 + $0x70] sm:$0xff]
    %v69 = vld [vmem:[#allocation6 + $0x78] sm:$0xff]
    %vm70 = vcmask 523264
    %v72 = vsel %vm70, %v52, 0
    %v75 = vsel %vm70, %v53, 0
    %77 = vmatprep.subr.mxu0 %v55
    %78 = vmatpush1.msra.mxu0 %v54
    %79 = vmatprep.subr.mxu0 %v57
    %80 = vmatpush1.msra.mxu0 %v56
    %81 = vmatprep.subr.mxu0 %v59
    %82 = vmatpush1.msra.mxu0 %v58
    %83 = vmatprep.subr.mxu0 %v61
    %84 = vmatpush1.msra.mxu0 %v60
    %85 = vmatprep.subr.mxu0 %v63
    %86 = vmatpush1.msra.mxu0 %v62
    %87 = vmatprep.subr.mxu0 %v65
    %88 = vmatpush1.msra.mxu0 %v64
    %89 = vmatprep.subr.mxu0 %v67
    %90 = vmatpush1.msra.mxu0 %v66
    %91 = vmatprep.subr.mxu0 %v69
    %92 = vmatpush1.msra.mxu0 %v68
    %93 = vmatprep.subr.mxu0 0.0
    %94 = vmatpush1.msra.mxu0 0.0
    %95 = vmatprep.subr.mxu0 0.0
    %96 = vmatpush1.msra.mxu0 0.0
    %97 = vmatprep.subr.mxu0 0.0
    %98 = vmatpush1.msra.mxu0 0.0
    %99 = vmatprep.subr.mxu0 0.0
    %100 = vmatpush1.msra.mxu0 0.0
    %101 = vmatprep.subr.mxu0 0.0
    %102 = vmatpush1.msra.mxu0 0.0
    %103 = vmatprep.subr.mxu0 0.0
    %104 = vmatpush1.msra.mxu0 0.0
    %105 = vmatprep.subr.mxu0 0.0
    %106 = vmatpush1.msra.mxu0 0.0
    %107 = vmatprep.subr.mxu0 0.0
    %108 = vmatpush1.msra.mxu0 0.0
    %109 = vmatprep.subr.mxu0 0.0
    %110 = vmatpush1.msra.mxu0 0.0
    %111 = vmatprep.subr.mxu0 0.0
    %112 = vmatpush1.msra.mxu0 0.0
    %113 = vmatprep.subr.mxu0 0.0
    %114 = vmatpush1.msra.mxu0 0.0
    %115 = vmatprep.subr.mxu0 0.0
    %116 = vmatpush1.msra.mxu0 0.0
    %117 = vmatprep.subr.mxu0 0.0
    %118 = vmatpush1.msra.mxu0 0.0
    %119 = vmatprep.subr.mxu0 0.0
    %120 = vmatpush1.msra.mxu0 0.0
    %121 = vmatprep.subr.mxu0 0.0
    %122 = vmatpush1.msra.mxu0 0.0
    %123 = vmatprep.subr.mxu0 0.0
    %124 = vmatpush1.msra.mxu0 0.0
    %125 = vmatprep.subr.mxu0 0.0
    %126 = vmatpush1.msra.mxu0 0.0
    %127 = vmatprep.subr.mxu0 0.0
    %128 = vmatpush1.msra.mxu0 0.0
    %129 = vmatprep.subr.mxu0 0.0
    %130 = vmatpush1.msra.mxu0 0.0
    %131 = vmatprep.subr.mxu0 0.0
    %132 = vmatpush1.msra.mxu0 0.0
    %133 = vmatprep.subr.mxu0 0.0
    %134 = vmatpush1.msra.mxu0 0.0
    %135 = vmatprep.subr.mxu0 0.0
    %136 = vmatpush1.msra.mxu0 0.0
    %137 = vmatprep.subr.mxu0 0.0
    %138 = vmatpush1.msra.mxu0 0.0
    %139 = vmatprep.subr.mxu0 0.0
    %140 = vmatpush1.msra.mxu0 0.0
    %141 = vmatprep.mubr.f32.mxu0 0.0
    %142 = vmatmul.mubr.f32.gmra.mrb[0].mxu0 %v72
    %v143 = vpop.f32.mrb[0].mxu0
    %v144 = vadd.f32 0.0, %v143
    %v145 = vpop.f32.mrb[0].mxu0
    %v146 = vadd.f32 0.0, %v145
    %147 = vmatprep.mubr.f32.mxu0 0.0
    %148 = vmatmul.mubr.f32.gmra.mrb[0].mxu0 %v75
    %v149 = vpop.f32.mrb[0].mxu0
    %v150 = vadd.f32 0.0, %v149
    %v151 = vpop.f32.mrb[0].mxu0
    %v152 = vadd.f32 0.0, %v151
    %153 = vdwg.mxu0
    %v154 = vadd.f32 %v48, %v144
    %v155 = vadd.f32 %v49, %v146
    %v156 = vadd.f32 %v50, %v150
    %v157 = vadd.f32 %v51, %v152
    %158 = vst [vmem:[#allocation2] sm:$0xff] %v154
    %159 = vst [vmem:[#allocation2 + $0x8] sm:$0xff] %v155
    %160 = vst [vmem:[#allocation2 + $0x10] sm:$0xff] %v156
    %161 = vst [vmem:[#allocation2 + $0x18] sm:$0xff] %v157
    // Predicated region
    $region22: #{tpu_custom_call.1} parent=1 // pred_check
      %p162 = pneg %p40
    $region23: #{tpu_custom_call.1} parent=1 // pred_check_branch
      %164 = sbr.rel (%p162) target = $region25
    $region24: #{tpu_custom_call.1} parent=1 // pred_region
      %v165 = vld [vmem:[#allocation2] sm:$0xff]
      %v166 = vld [vmem:[#allocation2 + $0x8] sm:$0xff]
      %v167 = vld [vmem:[#allocation2 + $0x10] sm:$0xff]
      %v168 = vld [vmem:[#allocation2 + $0x18] sm:$0xff]
      %169 = vst [vmem:[#allocation8] sm:$0xff] %v165
      %170 = vst [vmem:[#allocation8 + $0x8] sm:$0xff] %v166
      %171 = vst [vmem:[#allocation8 + $0x10] sm:$0xff] %v167
      %172 = vst [vmem:[#allocation8 + $0x18] sm:$0xff] %v168
    $region25: #{tpu_custom_call.1} parent=1 // pred_fallthru
      _
    // Predicated region
    $region26: #{tpu_custom_call.1} parent=1 // pred_check
      _
    $region27: #{tpu_custom_call.1} parent=1 // pred_check_branch
      %174 = sbr.rel (0) target = $region29
    $region28: #{tpu_custom_call.1} parent=1 // pred_region
      %s176 = ssub.s32 512, 512
      %177 = vsyncadd [#allocation5], %s176
      %s178 = sshll.u32 [#allocation8], 4
      %s179 = int_to_ptr.vmem [resolvable:$true] %s178
      %184 = dma.vmem_to_hbm [thread:$0]  %s179, 512, %s2, [#allocation5], 256, 256, 16
    $region29: #{tpu_custom_call.1} parent=1 // pred_fallthru
      _
    // Predicated region
    $region30: #{tpu_custom_call.1} parent=1 // pred_check
      _
    $region31: #{tpu_custom_call.1} parent=1 // pred_check_branch
      %186 = sbr.rel (0) target = $region33
    $region32: #{tpu_custom_call.1} parent=1 // pred_region
      %187 = dma.done [#allocation5], 512
    $region33: #{tpu_custom_call.1} parent=1 // pred_fallthru
      _
    %188 = vsyncpa [#allocation4], 1
    %189 = vsyncpa [#allocation7], 1
    %190 = vsyncpa [#allocation5], 1

</llo_original>
